<compile_context>
chip_gen: v6e
topology: v6e:2x2x1
jax: 0.10.0
libtpu: 0.0.40
codegen_flags: <defaults>
</compile_context>

<pallas_src>
import functools

import jax
import jax.numpy as jnp
from jax.experimental import pallas as pl
from jax.experimental.pallas import tpu as pltpu


# ----------------------------------------------------------------------------
# Kernel
# ----------------------------------------------------------------------------
def rou_kernel(x_ref, w_ref, b_ref, o_ref, acc_ref):
    """One (tm, tn) output tile of tanh(x @ w + b), accumulating over K."""
    k = pl.program_id(2)

    @pl.when(k == 0)
    def _():
        acc_ref[...] = jnp.zeros_like(acc_ref)

    # x tile: [tm, tk], w tile: [tk, tn] (already transposed in the wrapper).
    acc_ref[...] += jnp.dot(
        x_ref[...], w_ref[...], preferred_element_type=jnp.float32
    )

    @pl.when(k == pl.num_programs(2) - 1)
    def _():
        y = acc_ref[...] + b_ref[...].astype(jnp.float32)  # bias broadcast over rows
        o_ref[...] = jnp.tanh(y).astype(o_ref.dtype)


# ----------------------------------------------------------------------------
# Tiling plan
# ----------------------------------------------------------------------------
def _round_up(x, m):
    return (x + m - 1) // m * m


def _plan_tiles(m, n, k, in_itemsize):
    """Pick (tm, tn, tk) maximizing tile size under a ~40 MiB VMEM budget
    (valid on v7x's 64 MiB VMEM as well as v5e/v6e's 128 MiB)."""
    sub_align = 8 if in_itemsize >= 4 else 32 // in_itemsize  # 16 for bf16

    # Full-M block when M is moderate -> weight streamed from HBM exactly once.
    tm = _round_up(m, sub_align) if m <= 1024 else 512
    tn = min(512, _round_up(n, 128))
    tk = min(2048, _round_up(k, 128))  # ideally tk == K so the K axis collapses

    budget = 40 * 1024 * 1024

    def footprint(tm_, tn_, tk_):
        # double-buffered x / w / out tiles + f32 accumulator scratch
        return 2 * (tm_ * tk_ + tk_ * tn_ + tm_ * tn_) * in_itemsize + tm_ * tn_ * 4

    while footprint(tm, tn, tk) > budget and tk > 128:
        tk = max(128, (tk // 2) // 128 * 128)
    while footprint(tm, tn, tk) > budget and tn > 128:
        tn = max(128, (tn // 2) // 128 * 128)
    while footprint(tm, tn, tk) > budget and tm > sub_align:
        tm = max(sub_align, _round_up(tm // 2, sub_align))
    return tm, tn, tk


# ----------------------------------------------------------------------------
# Wrapper
# ----------------------------------------------------------------------------
@functools.partial(jax.jit, static_argnames=("compute_dtype", "allow_xla_fast_path"))
def rou_forward(x, weight, bias, compute_dtype=None, allow_xla_fast_path=False):
    """tanh(x @ weight.T + bias) — matches nn.Linear(ln, s) + nn.Tanh().

    x:      [batch, ln]
    weight: [s, ln]   (PyTorch Linear convention)
    bias:   [s]
    compute_dtype: optionally cast matmul operands (e.g. jnp.bfloat16 for
        v6e/v7x MXU throughput).  Accumulation and bias+tanh stay f32; output
        dtype follows the original x dtype.
    """
    m, k = x.shape
    n = weight.shape[0]
    out_dtype = x.dtype

    # Tiny-shape fast path (default off so the Pallas kernel is exercised).
    if allow_xla_fast_path and m * n * k <= 128 * 128 * 128:
        return jnp.tanh(x @ weight.T + bias).astype(out_dtype)

    # One-time weight transpose to [ln, s]: amortized to ~zero for a reused
    # parameter, and avoids any per-tile XLU transpose inside the kernel.
    w_t = weight.T
    if compute_dtype is not None:
        x = x.astype(compute_dtype)
        w_t = w_t.astype(compute_dtype)
    in_itemsize = jnp.dtype(x.dtype).itemsize

    tm, tn, tk = _plan_tiles(m, n, k, in_itemsize)

    # Pad ragged dims up to tile multiples (zeros are exact for the matmul;
    # padded rows/cols are sliced off below).
    pm, pn, pk = _round_up(m, tm), _round_up(n, tn), _round_up(k, tk)
    if (pm, pk) != (m, k):
        x = jnp.pad(x, ((0, pm - m), (0, pk - k)))
    if (pk, pn) != (k, n):
        w_t = jnp.pad(w_t, ((0, pk - k), (0, pn - n)))
    b2 = bias.reshape(1, n)
    if pn != n:
        b2 = jnp.pad(b2, ((0, 0), (0, pn - n)))

    grid = (pm // tm, pn // tn, pk // tk)

    # Advisory cost: account for re-streaming (x read N/tn times, w read M/tm
    # times) with actual itemsizes.
    bias_bytes = jnp.dtype(b2.dtype).itemsize
    out_bytes = jnp.dtype(out_dtype).itemsize
    cost = pl.CostEstimate(
        flops=2 * pm * pk * pn,
        transcendentals=pm * pn,
        bytes_accessed=(
            grid[1] * pm * pk * in_itemsize      # x re-streamed per N tile
            + grid[0] * pk * pn * in_itemsize    # weight re-streamed per M tile
            + grid[0] * pn * bias_bytes          # bias per (i, j)
            + pm * pn * out_bytes                # output written once
        ),
    )

    out = pl.pallas_call(
        rou_kernel,
        out_shape=jax.ShapeDtypeStruct((pm, pn), out_dtype),
        grid_spec=pltpu.PrefetchScalarGridSpec(
            num_scalar_prefetch=0,
            grid=grid,
            in_specs=[
                pl.BlockSpec((tm, tk), lambda i, j, kk: (i, kk)),  # x
                pl.BlockSpec((tk, tn), lambda i, j, kk: (kk, j)),  # weight.T [ln, s]
                pl.BlockSpec((1, tn), lambda i, j, kk: (0, j)),    # bias slice
            ],
            out_specs=pl.BlockSpec((tm, tn), lambda i, j, kk: (i, j)),
            scratch_shapes=[pltpu.VMEM((tm, tn), jnp.float32)],
        ),
        compiler_params=pltpu.CompilerParams(
            dimension_semantics=("parallel", "parallel", "arbitrary"),
            vmem_limit_bytes=48 * 1024 * 1024,
        ),
        cost_estimate=cost,
    )(x, w_t, b2)

    if (pm, pn) != (m, n):
        out = out[:m, :n]
    return out


# ----------------------------------------------------------------------------
# Demo / correctness check
# ----------------------------------------------------------------------------
if __name__ == "__main__":
    # Rou(ln, s): small shapes consistent with a Linear forward.
    batch, ln, s = 8, 32, 16

    key = jax.random.PRNGKey(0)
    kx, kw, kb = jax.random.split(key, 3)

    # Deterministic synthetic parameter init (PyTorch-style uniform bound).
    bound = 1.0 / (ln ** 0.5)
    x = jax.random.normal(kx, (batch, ln), dtype=jnp.float32)
    weight = jax.random.uniform(kw, (s, ln), minval=-bound, maxval=bound,
                                dtype=jnp.float32)
    bias = jax.random.uniform(kb, (s,), minval=-bound, maxval=bound,
                              dtype=jnp.float32)

    ref = jnp.tanh(x @ weight.T + bias)

    # f32 path (tight check).
    out = jax.block_until_ready(rou_forward(x, weight, bias))
    assert out.shape == (batch, s)
    assert jnp.allclose(out, ref, atol=1e-5, rtol=1e-5)

    # bf16-operand path (v6e/v7x MXU throughput); f32 accumulation + epilogue.
    out_bf16 = jax.block_until_ready(
        rou_forward(x, weight, bias, compute_dtype=jnp.bfloat16))
    assert out_bf16.shape == (batch, s)
    assert jnp.allclose(out_bf16, ref, atol=2e-2, rtol=2e-2)

    print("KERNEL_OK")
</pallas_src>

<mosaic_0001>
module attributes {stable_mosaic.version = 11 : i64} {
  func.func @rou_kernel(%arg0: i32, %arg1: i32, %arg2: i32, %arg3: memref<8x128xf32, #tpu.memory_space<vmem>>, %arg4: memref<128x128xf32, #tpu.memory_space<vmem>>, %arg5: memref<1x128xf32, #tpu.memory_space<vmem>>, %arg6: memref<8x128xf32, #tpu.memory_space<vmem>>, %arg7: memref<8x128xf32, #tpu.memory_space<vmem>>) attributes {dimension_semantics = [#tpu.dimension_semantics<parallel>, #tpu.dimension_semantics<parallel>, #tpu.dimension_semantics<arbitrary>], iteration_bounds = array<i64: 1, 1, 1>, scalar_prefetch = 0 : i64, scratch_operands = 1 : i64, tpu.core_type = #tpu.core_type<tc>, window_params = [{transform_indices = @transform_0, window_bounds = array<i64: 8, 128>}, {transform_indices = @transform_1, window_bounds = array<i64: 128, 128>}, {transform_indices = @transform_2, window_bounds = array<i64: 1, 128>}, {transform_indices = @transform_3, window_bounds = array<i64: 8, 128>}]} {
    %c0_i32 = arith.constant 0 : i32
    %0 = arith.cmpi eq, %arg2, %c0_i32 : i32
    %1 = arith.extui %0 : i1 to i32
    %c0_i32_0 = arith.constant 0 : i32
    %2 = arith.cmpi ne, %1, %c0_i32_0 : i32
    scf.if %2 {
      %cst_10 = arith.constant 0.000000e+00 : f32
      %12 = vector.broadcast %cst_10 : f32 to vector<8x128xf32>
      %c0_11 = arith.constant 0 : index
      %c0_12 = arith.constant 0 : index
      %13 = vector.load %arg7[%c0_11, %c0_12] : memref<8x128xf32, #tpu.memory_space<vmem>>, vector<8x128xf32>
      tpu.vector_store %arg7[%c0_11, %c0_12], %12 {strides = array<i32>} : memref<8x128xf32, #tpu.memory_space<vmem>>, vector<8x128xf32>,
    } else {
    }
    %c0 = arith.constant 0 : index
    %c0_1 = arith.constant 0 : index
    %3 = vector.load %arg7[%c0, %c0_1] : memref<8x128xf32, #tpu.memory_space<vmem>>, vector<8x128xf32>
    %c0_2 = arith.constant 0 : index
    %c0_3 = arith.constant 0 : index
    %4 = vector.load %arg3[%c0_2, %c0_3] : memref<8x128xf32, #tpu.memory_space<vmem>>, vector<8x128xf32>
    %c0_4 = arith.constant 0 : index
    %c0_5 = arith.constant 0 : index
    %5 = vector.load %arg4[%c0_4, %c0_5] : memref<128x128xf32, #tpu.memory_space<vmem>>, vector<128x128xf32>
    %cst = arith.constant dense<0.000000e+00> : vector<8x128xf32>
    %6 = tpu.matmul %4, %5, %cst {dimension_numbers = #tpu.dot_dimension_numbers<[1], [0], [0], [1], [0, 0, 1, 1], [], []>} : vector<8x128xf32>, vector<128x128xf32>, vector<8x128xf32> -> vector<8x128xf32>
    %7 = arith.addf %3, %6 : vector<8x128xf32>
    %c0_6 = arith.constant 0 : index
    %c0_7 = arith.constant 0 : index
    %8 = vector.load %arg7[%c0_6, %c0_7] : memref<8x128xf32, #tpu.memory_space<vmem>>, vector<8x128xf32>
    tpu.vector_store %arg7[%c0_6, %c0_7], %7 {strides = array<i32>} : memref<8x128xf32, #tpu.memory_space<vmem>>, vector<8x128xf32>,
    %c0_i32_8 = arith.constant 0 : i32
    %9 = arith.cmpi eq, %arg2, %c0_i32_8 : i32
    %10 = arith.extui %9 : i1 to i32
    %c0_i32_9 = arith.constant 0 : i32
    %11 = arith.cmpi ne, %10, %c0_i32_9 : i32
    scf.if %11 {
      %c0_10 = arith.constant 0 : index
      %c0_11 = arith.constant 0 : index
      %12 = vector.load %arg7[%c0_10, %c0_11] : memref<8x128xf32, #tpu.memory_space<vmem>>, vector<8x128xf32>
      %c0_12 = arith.constant 0 : index
      %c0_13 = arith.constant 0 : index
      %13 = vector.load %arg5[%c0_12, %c0_13] : memref<1x128xf32, #tpu.memory_space<vmem>>, vector<1x128xf32>
      %14 = vector.broadcast %13 : vector<1x128xf32> to vector<8x128xf32>
      %15 = arith.addf %12, %14 : vector<8x128xf32>
      %16 = math.tanh %15 : vector<8x128xf32>
      %c0_14 = arith.constant 0 : index
      %c0_15 = arith.constant 0 : index
      %17 = vector.load %arg6[%c0_14, %c0_15] : memref<8x128xf32, #tpu.memory_space<vmem>>, vector<8x128xf32>
      tpu.vector_store %arg6[%c0_14, %c0_15], %16 {strides = array<i32>} : memref<8x128xf32, #tpu.memory_space<vmem>>, vector<8x128xf32>,
    } else {
    }
    return
  }
  func.func @transform_0(%arg0: i32, %arg1: i32, %arg2: i32) -> (i32, i32) {
    %c0_i32 = arith.constant 0 : i32
    return %arg0, %arg2 : i32, i32
  }
  func.func @transform_1(%arg0: i32, %arg1: i32, %arg2: i32) -> (i32, i32) {
    %c0_i32 = arith.constant 0 : i32
    return %arg2, %arg1 : i32, i32
  }
  func.func @transform_2(%arg0: i32, %arg1: i32, %arg2: i32) -> (i32, i32) {
    %c0_i32 = arith.constant 0 : i32
    %c0_i32_0 = arith.constant 0 : i32
    return %c0_i32, %arg1 : i32, i32
  }
  func.func @transform_3(%arg0: i32, %arg1: i32, %arg2: i32) -> (i32, i32) {
    %c0_i32 = arith.constant 0 : i32
    return %arg0, %arg1 : i32, i32
  }
}

</mosaic_0001>

<llo_original>
// kernel: rou_forward.1
$region0: #{rou_forward.1}
  #allocation0 [shape = 'u32[]', space=smem, size = 0x4, offset = 0x4, fixed_abs, tag = 'smem constant byte address 0x4 - core index']
  #allocation1 [shape = 'u32[144,128]{1,0:T(1,128)}', space=vmem, size = 0x12000, scoped, tag = 'internal scratch']
  #allocation2 [shape = 'f32[8,128]{1,0:T(8,128)}', space=vmem, size = 0x1000, scoped, tag = 'scratch operand']
  %s0 = inlined_call_operand.vmem [shape: f32[8,128], index: 0, kind: input, shape index: {}]
  %s1 = inlined_call_operand.vmem [shape: f32[128,128], index: 1, kind: input, shape index: {}]
  %s2 = inlined_call_operand.vmem [shape: f32[1,128], index: 2, kind: input, shape index: {}]
  %s3 = inlined_call_operand.hbm [shape: f32[8,128], index: 3, kind: output, shape index: {}]
  %s4 = sld [smem:[#allocation0]]
  $region30: #{rou_forward.1} parent=0
    _
  %s6 = ssub.s32 1, %s4
  %s7 = scalar_select 0, %s6, %s4
  $region1: #{rou_forward.1} parent=0
    #allocation3 [shape = 'u8[4096]{0}', space=vmem, size = 0x1000, scoped, tag = 'output window, operand 0, single buffered']
    #allocation4 [shape = 's32[1]{0}', space=sflag, size = 0x4, scoped, tag = 'scoped memory for rou_forward.1']
    %8 = vsyncpa [#allocation4], 0
    // Predicated region
    $region2: #{rou_forward.1} parent=1 // pred_check
      _
    $region3: #{rou_forward.1} parent=1 // pred_check_branch
      %10 = sbr.rel (0) target = $region5
    $region4: #{rou_forward.1} parent=1 // pred_region
      _
    $region5: #{rou_forward.1} parent=1 // pred_fallthru
      _
    // Predicated region
    $region6: #{rou_forward.1} parent=1 // pred_check
      _
    $region7: #{rou_forward.1} parent=1 // pred_check_branch
      %12 = sbr.rel (0) target = $region9
    $region8: #{rou_forward.1} parent=1 // pred_region
      _
    $region9: #{rou_forward.1} parent=1 // pred_fallthru
      _
    // Predicated region
    $region10: #{rou_forward.1} parent=1 // pred_check
      _
    $region11: #{rou_forward.1} parent=1 // pred_check_branch
      %14 = sbr.rel (0) target = $region13
    $region12: #{rou_forward.1} parent=1 // pred_region
      _
    $region13: #{rou_forward.1} parent=1 // pred_fallthru
      _
    %p15 = scmp.eq.s32.totalorder 0, 0
    // Predicated region
    $region14: #{rou_forward.1} parent=1 // pred_check
      %p16 = pneg %p15
    $region15: #{rou_forward.1} parent=1 // pred_check_branch
      %18 = sbr.rel (%p16) target = $region17
    $region16: #{rou_forward.1} parent=1 // pred_region
      %19 = vst [vmem:[#allocation2] sm:$0xff] 0.0
    $region17: #{rou_forward.1} parent=1 // pred_fallthru
      _
    %v20 = vld [vmem:[#allocation2] sm:$0xff]
    %v21 = vld [vmem:[%s0] sm:$0xff]
    %v22 = vld [vmem:[%s1] sm:$0xff]
    %v23 = vld [vmem:[%s1 + $0x8] sm:$0xff]
    %v24 = vld [vmem:[%s1 + $0x10] sm:$0xff]
    %v25 = vld [vmem:[%s1 + $0x18] sm:$0xff]
    %v26 = vld [vmem:[%s1 + $0x20] sm:$0xff]
    %v27 = vld [vmem:[%s1 + $0x28] sm:$0xff]
    %v28 = vld [vmem:[%s1 + $0x30] sm:$0xff]
    %v29 = vld [vmem:[%s1 + $0x38] sm:$0xff]
    %v30 = vld [vmem:[%s1 + $0x40] sm:$0xff]
    %v31 = vld [vmem:[%s1 + $0x48] sm:$0xff]
    %v32 = vld [vmem:[%s1 + $0x50] sm:$0xff]
    %v33 = vld [vmem:[%s1 + $0x58] sm:$0xff]
    %v34 = vld [vmem:[%s1 + $0x60] sm:$0xff]
    %v35 = vld [vmem:[%s1 + $0x68] sm:$0xff]
    %v36 = vld [vmem:[%s1 + $0x70] sm:$0xff]
    %v37 = vld [vmem:[%s1 + $0x78] sm:$0xff]
    %38 = vmatprep.subr.mxu0 0.0
    %39 = vmatpush1.msra.mxu0 %v37
    %40 = vmatprep.subr.mxu0 0.0
    %41 = vmatpush1.msra.mxu0 %v36
    %42 = vmatprep.subr.mxu0 0.0
    %43 = vmatpush1.msra.mxu0 %v35
    %44 = vmatprep.subr.mxu0 0.0
    %45 = vmatpush1.msra.mxu0 %v34
    %46 = vmatprep.subr.mxu0 0.0
    %47 = vmatpush1.msra.mxu0 %v33
    %48 = vmatprep.subr.mxu0 0.0
    %49 = vmatpush1.msra.mxu0 %v32
    %50 = vmatprep.subr.mxu0 0.0
    %51 = vmatpush1.msra.mxu0 %v31
    %52 = vmatprep.subr.mxu0 0.0
    %53 = vmatpush1.msra.mxu0 %v30
    %54 = vmatprep.subr.mxu0 0.0
    %55 = vmatpush1.msra.mxu0 %v29
    %56 = vmatprep.subr.mxu0 0.0
    %57 = vmatpush1.msra.mxu0 %v28
    %58 = vmatprep.subr.mxu0 0.0
    %59 = vmatpush1.msra.mxu0 %v27
    %60 = vmatprep.subr.mxu0 0.0
    %61 = vmatpush1.msra.mxu0 %v26
    %62 = vmatprep.subr.mxu0 0.0
    %63 = vmatpush1.msra.mxu0 %v25
    %64 = vmatprep.subr.mxu0 0.0
    %65 = vmatpush1.msra.mxu0 %v24
    %66 = vmatprep.subr.mxu0 0.0
    %67 = vmatpush1.msra.mxu0 %v23
    %68 = vmatprep.subr.mxu0 0.0
    %69 = vmatpush1.msra.mxu0 %v22
    %70 = vmatprep.subr.mxu0 0.0
    %71 = vmatpush2.msra.mxu0 0.0
    %72 = vmatprep.subr.mxu0 0.0
    %73 = vmatpush2.msra.mxu0 0.0
    %74 = vmatprep.subr.mxu0 0.0
    %75 = vmatpush2.msra.mxu0 0.0
    %76 = vmatprep.subr.mxu0 0.0
    %77 = vmatpush2.msra.mxu0 0.0
    %78 = vmatprep.subr.mxu0 0.0
    %79 = vmatpush2.msra.mxu0 0.0
    %80 = vmatprep.subr.mxu0 0.0
    %81 = vmatpush2.msra.mxu0 0.0
    %82 = vmatprep.subr.mxu0 0.0
    %83 = vmatpush2.msra.mxu0 0.0
    %84 = vmatprep.subr.mxu0 0.0
    %85 = vmatpush2.msra.mxu0 0.0
    %86 = vmatprep.subr.mxu0 0.0
    %87 = vmatpush2.msra.mxu0 0.0
    %88 = vmatprep.subr.mxu0 0.0
    %89 = vmatpush2.msra.mxu0 0.0
    %90 = vmatprep.subr.mxu0 0.0
    %91 = vmatpush2.msra.mxu0 0.0
    %92 = vmatprep.subr.mxu0 0.0
    %93 = vmatpush2.msra.mxu0 0.0
    %94 = vmatprep.subr.mxu0 0.0
    %95 = vmatpush2.msra.mxu0 0.0
    %96 = vmatprep.subr.mxu0 0.0
    %97 = vmatpush2.msra.mxu0 0.0
    %98 = vmatprep.subr.mxu0 0.0
    %99 = vmatpush2.msra.mxu0 0.0
    %100 = vmatprep.subr.mxu0 0.0
    %101 = vmatpush2.msra.mxu0 0.0
    %102 = vmatprep.mubr.f32.mxu0 0.0
    %103 = vmatmul.mubr.f32.gmra.mxu0 %v21
    %v104 = vpop.f32.mrf.mxu0
    %v105 = vadd.f32 0.0, %v104
    %v106 = vpop.f32.mrf.mxu0
    %107 = vdwg.mxu0
    %v108 = vadd.f32 %v20, %v105
    %109 = vst [vmem:[#allocation2] sm:$0xff] %v108
    // Predicated region
    $region18: #{rou_forward.1} parent=1 // pred_check
      %p110 = pneg %p15
    $region19: #{rou_forward.1} parent=1 // pred_check_branch
      %112 = sbr.rel (%p110) target = $region21
    $region20: #{rou_forward.1} parent=1 // pred_region
      %v113 = vld [vmem:[#allocation2] sm:$0xff]
      %v114 = vld [vmem:[%s2] sm:$0x1]
      %v116 = vlaneseq
      %v117 = vshrl.u32 %v116, 7
      %v118 = vsub.s32 0, %v117
      %v119 = vrot.slane %v114, %v118
      %v121 = vadd.f32 %v113, %v119
      %v122 = vtanh.pop %v121
      %123 = vst [vmem:[#allocation3] sm:$0xff] %v122
    $region21: #{rou_forward.1} parent=1 // pred_fallthru
      _
    // Predicated region
    $region22: #{rou_forward.1} parent=1 // pred_check
      _
    $region23: #{rou_forward.1} parent=1 // pred_check_branch
      %125 = sbr.rel (0) target = $region25
    $region24: #{rou_forward.1} parent=1 // pred_region
      %s127 = ssub.s32 128, 128
      %128 = vsyncadd [#allocation4], %s127
      %s130 = sshll.u32 [#allocation3], 4
      %s131 = int_to_ptr.vmem [resolvable:$true] %s130
      %133 = dma.vmem_to_hbm [thread:$0]  %s131, 128, %s3, [#allocation4]
    $region25: #{rou_forward.1} parent=1 // pred_fallthru
      _
    // Predicated region
    $region26: #{rou_forward.1} parent=1 // pred_check
      _
    $region27: #{rou_forward.1} parent=1 // pred_check_branch
      %135 = sbr.rel (0) target = $region29
    $region28: #{rou_forward.1} parent=1 // pred_region
      %136 = dma.done [#allocation4], 128
    $region29: #{rou_forward.1} parent=1 // pred_fallthru
      _
    %137 = vsyncpa [#allocation4], 1

</llo_original>
